<compile_context>
chip_gen: v7x
topology: tpu7x:2x2x1
jax: 0.10.0
libtpu: 0.0.40
codegen_flags: <defaults>
</compile_context>

<pallas_src>
import jax
import jax.numpy as jnp
from jax.experimental import pallas as pl
from jax.experimental.pallas import tpu as pltpu


def _round_up(x: int, m: int) -> int:
    return ((x + m - 1) // m) * m


def _tile_and_pad(dim: int, max_tile: int, align: int):
    """Pick (tile, padded_dim) for one GEMM dimension.

    If the whole dimension fits in one block we use a full-extent block (exempt from
    the (8,128) alignment rule) -> no padding, no extra HBM copy, no grid axis.
    Otherwise split into ceil(dim/max_tile) tiles, each rounded up to `align`.
    """
    if dim <= max_tile:
        return dim, dim
    n_tiles = -(-dim // max_tile)                    # cdiv
    tile = _round_up(-(-dim // n_tiles), align)      # <= max_tile by construction
    return tile, tile * n_tiles


# --------------------------- kernels ---------------------------------------

def _linear_kernel_single_k(x_ref, w_ref, b_ref, o_ref):
    # K fits one block: dot straight into the output -- no accumulator round-trip.
    # x_ref: (tm, K)  w_ref: (K, tn)  b_ref: (1, tn)  o_ref: (tm, tn)
    o_ref[...] = (
        jnp.dot(x_ref[...], w_ref[...], preferred_element_type=jnp.float32)
        + b_ref[...]
    ).astype(o_ref.dtype)


def _linear_kernel_multi_k(x_ref, w_ref, b_ref, o_ref, acc_ref):
    # x_ref: (tm, tk)  w_ref: (tk, tn)  b_ref: (1, tn)  o_ref: (tm, tn)  acc: f32 (tm, tn)
    k = pl.program_id(2)

    @pl.when(k == 0)
    def _():
        acc_ref[...] = jnp.zeros_like(acc_ref)

    # W is pre-transposed to [K, N]: canonical MXU contraction, no in-kernel transpose.
    acc_ref[...] += jnp.dot(x_ref[...], w_ref[...],
                            preferred_element_type=jnp.float32)

    @pl.when(k == pl.num_programs(2) - 1)
    def _():
        o_ref[...] = (acc_ref[...] + b_ref[...]).astype(o_ref.dtype)


# --------------------------- wrapper ----------------------------------------

def linear_forward(x, weight, bias, *, compute_dtype=None):
    """y = x @ weight.T + bias, matching torch.nn.Linear semantics.

    compute_dtype: optionally e.g. jnp.bfloat16 to run the MXU at native rate
    (accumulation stays f32).  Default None keeps full f32 numerics.
    """
    B, IN = x.shape
    OUT, IN_w = weight.shape
    assert IN == IN_w, "weight in_features mismatch"
    assert bias.shape == (OUT,)
    out_dtype = x.dtype

    # One-time transpose of W to [IN, OUT] (lane-dense along N / the output axis).
    w_t = weight.T
    if compute_dtype is not None:
        x = x.astype(compute_dtype)
        w_t = w_t.astype(compute_dtype)

    # ---- Tile selection (skinny/LR fast path + large-problem 512/512/2048 tiles). ----
    tm, B_p = _tile_and_pad(B, 512, 8)        # sublane axis of x / out
    tn, OUT_p = _tile_and_pad(OUT, 512, 128)  # lane axis of W_t / bias / out
    tk, IN_p = _tile_and_pad(IN, 2048, 128)   # lane axis of x, sublane axis of W_t

    # ---- Zero-pad only when tiling forces it (zeros along K are neutral; padded
    #      batch rows / OUT columns are sliced off below). ----
    x_p = x if (B_p, IN_p) == (B, IN) else jnp.pad(
        x, ((0, B_p - B), (0, IN_p - IN)))
    w_p = w_t if (IN_p, OUT_p) == (IN, OUT) else jnp.pad(
        w_t, ((0, IN_p - IN), (0, OUT_p - OUT)))
    b_p = bias if OUT_p == OUT else jnp.pad(bias, (0, OUT_p - OUT))
    b_p = b_p.reshape(1, OUT_p)

    gm, gn, gk = B_p // tm, OUT_p // tn, IN_p // tk

    cost = pl.CostEstimate(
        flops=2 * B_p * IN_p * OUT_p,
        transcendentals=0,
        bytes_accessed=(x_p.size * x_p.dtype.itemsize * gn     # x re-streamed per N tile
                        + w_p.size * w_p.dtype.itemsize * gm   # W re-streamed per M tile
                        + b_p.size * b_p.dtype.itemsize
                        + B_p * OUT_p * out_dtype.itemsize),
    )
    compiler_params = pltpu.CompilerParams(
        dimension_semantics=(("parallel", "parallel", "arbitrary") if gk > 1
                             else ("parallel", "parallel")),
        # ~19 MiB double-buffered working set at 512/512/2048 f32 tiles: above v5e's
        # 16 MiB scoped default, comfortably inside v7x's 64 MiB physical VMEM.
        vmem_limit_bytes=48 * 1024 * 1024,
    )
    # NOTE(v7x): for mid-size problems that collapse to a single (M, N) block the
    # parallel grid has only 1 point; we do not force-split it because on single-TC
    # chips (v5e/v6e) that would double W streaming in this memory-bound regime.

    if gk == 1:
        # Fast path: K resident, no accumulator scratch, 2-D grid.
        grid_spec = pltpu.PrefetchScalarGridSpec(
            num_scalar_prefetch=0,
            grid=(gm, gn),
            in_specs=[
                pl.BlockSpec((tm, tk), lambda i, j: (i, 0)),   # x tile
                pl.BlockSpec((tk, tn), lambda i, j: (0, j)),   # W_t tile ([K, N])
                pl.BlockSpec((1, tn), lambda i, j: (0, j)),    # bias tile
            ],
            out_specs=pl.BlockSpec((tm, tn), lambda i, j: (i, j)),
        )
        kernel = _linear_kernel_single_k
    else:
        grid_spec = pltpu.PrefetchScalarGridSpec(
            num_scalar_prefetch=0,
            grid=(gm, gn, gk),
            in_specs=[
                pl.BlockSpec((tm, tk), lambda i, j, k: (i, k)),   # x tile
                pl.BlockSpec((tk, tn), lambda i, j, k: (k, j)),   # W_t tile ([K, N])
                pl.BlockSpec((1, tn), lambda i, j, k: (0, j)),    # bias tile
            ],
            out_specs=pl.BlockSpec((tm, tn), lambda i, j, k: (i, j)),
            scratch_shapes=[pltpu.VMEM((tm, tn), jnp.float32)],
        )
        kernel = _linear_kernel_multi_k

    y_p = pl.pallas_call(
        kernel,
        out_shape=jax.ShapeDtypeStruct((B_p, OUT_p), out_dtype),
        grid_spec=grid_spec,
        compiler_params=compiler_params,
        cost_estimate=cost,
    )(x_p, w_p, b_p)

    if (B_p, OUT_p) != (B, OUT):
        y_p = y_p[:B, :OUT]
    return y_p


if __name__ == "__main__":
    # Small shapes consistent with a multiple-linear-regression layer.
    batch, input_size, output_size = 8, 32, 16

    key = jax.random.PRNGKey(0)
    kx, kw, kb = jax.random.split(key, 3)

    x = jax.random.normal(kx, (batch, input_size), dtype=jnp.float32)
    # Deterministic init mimicking nn.Linear's uniform(-1/sqrt(in), 1/sqrt(in)).
    bound = 1.0 / jnp.sqrt(jnp.float32(input_size))
    weight = jax.random.uniform(kw, (output_size, input_size),
                                dtype=jnp.float32, minval=-bound, maxval=bound)
    bias = jax.random.uniform(kb, (output_size,),
                              dtype=jnp.float32, minval=-bound, maxval=bound)

    y = linear_forward(x, weight, bias)
    jax.block_until_ready(y)

    y_ref = x @ weight.T + bias
    assert y.shape == (batch, output_size)
    assert jnp.allclose(y, y_ref, atol=1e-5, rtol=1e-5)

    # Medium shape: single-K fast path with full-extent blocks (no padding path).
    kx2, kw2, kb2 = jax.random.split(jax.random.PRNGKey(1), 3)
    B2, IN2, OUT2 = 512, 1024, 384
    x2 = jax.random.normal(kx2, (B2, IN2), dtype=jnp.float32)
    w2 = jax.random.normal(kw2, (OUT2, IN2), dtype=jnp.float32) * 0.02
    b2 = jax.random.normal(kb2, (OUT2,), dtype=jnp.float32)
    y2 = linear_forward(x2, w2, b2)
    jax.block_until_ready(y2)
    y2_ref = x2 @ w2.T + b2
    assert jnp.allclose(y2, y2_ref, atol=1e-3, rtol=1e-3)

    # Large, unaligned shape: exercises the tiled (M, N, K) grid, accumulator and
    # the pad-only-when-tiling path.
    kx3, kw3, kb3 = jax.random.split(jax.random.PRNGKey(2), 3)
    B3, IN3, OUT3 = 600, 4100, 700
    x3 = jax.random.normal(kx3, (B3, IN3), dtype=jnp.float32)
    w3 = jax.random.normal(kw3, (OUT3, IN3), dtype=jnp.float32) * 0.02
    b3 = jax.random.normal(kb3, (OUT3,), dtype=jnp.float32)
    y3 = linear_forward(x3, w3, b3)
    jax.block_until_ready(y3)
    y3_ref = x3 @ w3.T + b3
    assert jnp.allclose(y3, y3_ref, atol=1e-2, rtol=1e-2)

    print("KERNEL_OK")
</pallas_src>

<mosaic_0001>
module attributes {stable_mosaic.version = 11 : i64} {
  func.func @_linear_kernel_single_k(%arg0: i32, %arg1: i32, %arg2: memref<8x32xf32, #tpu.memory_space<vmem>>, %arg3: memref<32x16xf32, #tpu.memory_space<vmem>>, %arg4: memref<1x16xf32, #tpu.memory_space<vmem>>, %arg5: memref<8x16xf32, #tpu.memory_space<vmem>>) attributes {dimension_semantics = [#tpu.dimension_semantics<parallel>, #tpu.dimension_semantics<parallel>], iteration_bounds = array<i64: 1, 1>, scalar_prefetch = 0 : i64, scratch_operands = 0 : i64, tpu.core_type = #tpu.core_type<tc>, window_params = [{transform_indices = @transform_0, window_bounds = array<i64: 8, 32>}, {transform_indices = @transform_1, window_bounds = array<i64: 32, 16>}, {transform_indices = @transform_2, window_bounds = array<i64: 1, 16>}, {transform_indices = @transform_3, window_bounds = array<i64: 8, 16>}]} {
    %c0 = arith.constant 0 : index
    %c0_0 = arith.constant 0 : index
    %0 = vector.load %arg2[%c0, %c0_0] : memref<8x32xf32, #tpu.memory_space<vmem>>, vector<8x32xf32>
    %c0_1 = arith.constant 0 : index
    %c0_2 = arith.constant 0 : index
    %1 = vector.load %arg3[%c0_1, %c0_2] : memref<32x16xf32, #tpu.memory_space<vmem>>, vector<32x16xf32>
    %cst = arith.constant dense<0.000000e+00> : vector<8x16xf32>
    %2 = tpu.matmul %0, %1, %cst {dimension_numbers = #tpu.dot_dimension_numbers<[1], [0], [0], [1], [0, 0, 1, 1], [], []>} : vector<8x32xf32>, vector<32x16xf32>, vector<8x16xf32> -> vector<8x16xf32>
    %c0_3 = arith.constant 0 : index
    %c0_4 = arith.constant 0 : index
    %3 = vector.load %arg4[%c0_3, %c0_4] : memref<1x16xf32, #tpu.memory_space<vmem>>, vector<1x16xf32>
    %4 = vector.broadcast %3 : vector<1x16xf32> to vector<8x16xf32>
    %5 = arith.addf %2, %4 : vector<8x16xf32>
    %c0_5 = arith.constant 0 : index
    %c0_6 = arith.constant 0 : index
    %6 = vector.load %arg5[%c0_5, %c0_6] : memref<8x16xf32, #tpu.memory_space<vmem>>, vector<8x16xf32>
    tpu.vector_store %arg5[%c0_5, %c0_6], %5 {strides = array<i32>} : memref<8x16xf32, #tpu.memory_space<vmem>>, vector<8x16xf32>,
    return
  }
  func.func @transform_0(%arg0: i32, %arg1: i32) -> (i32, i32) {
    %c0_i32 = arith.constant 0 : i32
    %c0_i32_0 = arith.constant 0 : i32
    return %arg0, %c0_i32 : i32, i32
  }
  func.func @transform_1(%arg0: i32, %arg1: i32) -> (i32, i32) {
    %c0_i32 = arith.constant 0 : i32
    %c0_i32_0 = arith.constant 0 : i32
    return %c0_i32, %arg1 : i32, i32
  }
  func.func @transform_2(%arg0: i32, %arg1: i32) -> (i32, i32) {
    %c0_i32 = arith.constant 0 : i32
    %c0_i32_0 = arith.constant 0 : i32
    return %c0_i32, %arg1 : i32, i32
  }
  func.func @transform_3(%arg0: i32, %arg1: i32) -> (i32, i32) {
    %c0_i32 = arith.constant 0 : i32
    return %arg0, %arg1 : i32, i32
  }
}

</mosaic_0001>

<llo_original>
// kernel: tpu_custom_call.1
$region0: #{tpu_custom_call.1}
  #allocation0 [shape = 'u32[]', space=smem, size = 0x4, offset = 0x4, fixed_abs, tag = 'smem constant byte address 0x4 - core index']
  #allocation1 [shape = 'u32[144,128]{1,0:T(1,128)}', space=vmem, size = 0x12000, scoped, tag = 'internal scratch']
  %s0 = inlined_call_operand.vmem [shape: f32[8,32], index: 0, kind: input, shape index: {}]
  %s1 = inlined_call_operand.vmem [shape: f32[32,16], index: 1, kind: input, shape index: {}]
  %s2 = inlined_call_operand.vmem [shape: f32[1,16], index: 2, kind: input, shape index: {}]
  %s3 = inlined_call_operand.hbm [shape: f32[8,16], index: 3, kind: output, shape index: {}]
  %s4 = sld [smem:[#allocation0]]
  $region22: #{tpu_custom_call.1} parent=0
    _
  %s6 = ssub.s32 1, %s4
  %s7 = scalar_select 0, %s6, %s4
  $region1: #{tpu_custom_call.1} parent=0
    #allocation2 [shape = 'u8[4096]{0}', space=vmem, size = 0x1000, scoped, tag = 'output window, operand 0, single buffered']
    #allocation3 [shape = 's32[1]{0}', space=sflag, size = 0x4, scoped, tag = 'scoped memory for tpu_custom_call.1']
    %8 = vsyncpa [#allocation3], 0
    // Predicated region
    $region2: #{tpu_custom_call.1} parent=1 // pred_check
      _
    $region3: #{tpu_custom_call.1} parent=1 // pred_check_branch
      %10 = sbr.rel (0) target = $region5
    $region4: #{tpu_custom_call.1} parent=1 // pred_region
      _
    $region5: #{tpu_custom_call.1} parent=1 // pred_fallthru
      _
    // Predicated region
    $region6: #{tpu_custom_call.1} parent=1 // pred_check
      _
    $region7: #{tpu_custom_call.1} parent=1 // pred_check_branch
      %12 = sbr.rel (0) target = $region9
    $region8: #{tpu_custom_call.1} parent=1 // pred_region
      _
    $region9: #{tpu_custom_call.1} parent=1 // pred_fallthru
      _
    // Predicated region
    $region10: #{tpu_custom_call.1} parent=1 // pred_check
      _
    $region11: #{tpu_custom_call.1} parent=1 // pred_check_branch
      %14 = sbr.rel (0) target = $region13
    $region12: #{tpu_custom_call.1} parent=1 // pred_region
      _
    $region13: #{tpu_custom_call.1} parent=1 // pred_fallthru
      _
    %v15 = vld [vmem:[%s0] sm:$0xff]
    %v16 = vld [vmem:[%s1] sm:$0xff]
    %v17 = vld [vmem:[%s1 + $0x8] sm:$0xff]
    %v18 = vld [vmem:[%s1 + $0x10] sm:$0xff]
    %v19 = vld [vmem:[%s1 + $0x18] sm:$0xff]
    %v20 = vld [vmem:[%s2] sm:$0x1]
    %v22 = vlaneseq
    %v23 = vshrl.u32 %v22, 7
    %v24 = vsub.s32 0, %v23
    %v25 = vrot.slane %v20, %v24
    %vm27 = vcmask 261120
    %v29 = vsel %vm27, %v15, 0
    %31 = vmatprep.subr.mxu0 0.0
    %32 = vmatpush1.msra.mxu0 %v16
    %33 = vmatprep.subr.mxu0 0.0
    %34 = vmatpush1.msra.mxu0 %v17
    %35 = vmatprep.subr.mxu0 0.0
    %36 = vmatpush1.msra.mxu0 %v18
    %37 = vmatprep.subr.mxu0 0.0
    %38 = vmatpush1.msra.mxu0 %v19
    %39 = vmatprep.subr.mxu0 0.0
    %40 = vmatpush1.msra.mxu0 0.0
    %41 = vmatprep.subr.mxu0 0.0
    %42 = vmatpush1.msra.mxu0 0.0
    %43 = vmatprep.subr.mxu0 0.0
    %44 = vmatpush1.msra.mxu0 0.0
    %45 = vmatprep.subr.mxu0 0.0
    %46 = vmatpush1.msra.mxu0 0.0
    %47 = vmatprep.subr.mxu0 0.0
    %48 = vmatpush1.msra.mxu0 0.0
    %49 = vmatprep.subr.mxu0 0.0
    %50 = vmatpush1.msra.mxu0 0.0
    %51 = vmatprep.subr.mxu0 0.0
    %52 = vmatpush1.msra.mxu0 0.0
    %53 = vmatprep.subr.mxu0 0.0
    %54 = vmatpush1.msra.mxu0 0.0
    %55 = vmatprep.subr.mxu0 0.0
    %56 = vmatpush1.msra.mxu0 0.0
    %57 = vmatprep.subr.mxu0 0.0
    %58 = vmatpush1.msra.mxu0 0.0
    %59 = vmatprep.subr.mxu0 0.0
    %60 = vmatpush1.msra.mxu0 0.0
    %61 = vmatprep.subr.mxu0 0.0
    %62 = vmatpush1.msra.mxu0 0.0
    %63 = vmatprep.subr.mxu0 0.0
    %64 = vmatpush1.msra.mxu0 0.0
    %65 = vmatprep.subr.mxu0 0.0
    %66 = vmatpush1.msra.mxu0 0.0
    %67 = vmatprep.subr.mxu0 0.0
    %68 = vmatpush1.msra.mxu0 0.0
    %69 = vmatprep.subr.mxu0 0.0
    %70 = vmatpush1.msra.mxu0 0.0
    %71 = vmatprep.subr.mxu0 0.0
    %72 = vmatpush1.msra.mxu0 0.0
    %73 = vmatprep.subr.mxu0 0.0
    %74 = vmatpush1.msra.mxu0 0.0
    %75 = vmatprep.subr.mxu0 0.0
    %76 = vmatpush1.msra.mxu0 0.0
    %77 = vmatprep.subr.mxu0 0.0
    %78 = vmatpush1.msra.mxu0 0.0
    %79 = vmatprep.subr.mxu0 0.0
    %80 = vmatpush1.msra.mxu0 0.0
    %81 = vmatprep.subr.mxu0 0.0
    %82 = vmatpush1.msra.mxu0 0.0
    %83 = vmatprep.subr.mxu0 0.0
    %84 = vmatpush1.msra.mxu0 0.0
    %85 = vmatprep.subr.mxu0 0.0
    %86 = vmatpush1.msra.mxu0 0.0
    %87 = vmatprep.subr.mxu0 0.0
    %88 = vmatpush1.msra.mxu0 0.0
    %89 = vmatprep.subr.mxu0 0.0
    %90 = vmatpush1.msra.mxu0 0.0
    %91 = vmatprep.subr.mxu0 0.0
    %92 = vmatpush1.msra.mxu0 0.0
    %93 = vmatprep.subr.mxu0 0.0
    %94 = vmatpush1.msra.mxu0 0.0
    %95 = vmatprep.mubr.f32.mxu0 0.0
    %96 = vmatmul.mubr.f32.gmra.mrb[0].mxu0 %v29
    %v97 = vpop.f32.mrb[0].mxu0
    %v98 = vadd.f32 %v25, %v97
    %v99 = vpop.f32.mrb[0].mxu0
    %100 = vdwg.mxu0
    %vm101 = vcmask 130048
    %102 = vst.msk [vmem:[#allocation2] sm:$0xff] %vm101, %v98
    // Predicated region
    $region14: #{tpu_custom_call.1} parent=1 // pred_check
      _
    $region15: #{tpu_custom_call.1} parent=1 // pred_check_branch
      %104 = sbr.rel (0) target = $region17
    $region16: #{tpu_custom_call.1} parent=1 // pred_region
      %s106 = ssub.s32 128, 128
      %107 = vsyncadd [#allocation3], %s106
      %s109 = sshll.u32 [#allocation2], 4
      %s110 = int_to_ptr.vmem [resolvable:$true] %s109
      %112 = dma.vmem_to_hbm [thread:$0]  %s110, 128, %s3, [#allocation3]
    $region17: #{tpu_custom_call.1} parent=1 // pred_fallthru
      _
    // Predicated region
    $region18: #{tpu_custom_call.1} parent=1 // pred_check
      _
    $region19: #{tpu_custom_call.1} parent=1 // pred_check_branch
      %114 = sbr.rel (0) target = $region21
    $region20: #{tpu_custom_call.1} parent=1 // pred_region
      %115 = dma.done [#allocation3], 128
    $region21: #{tpu_custom_call.1} parent=1 // pred_fallthru
      _
    %116 = vsyncpa [#allocation3], 1

</llo_original>
